<compile_context>
chip_gen: v5e
topology: v5e:2x2
jax: 0.10.0
libtpu: 0.0.40
codegen_flags: <defaults>
</compile_context>

<pallas_src>
import functools

import jax
import jax.numpy as jnp
from jax import lax
from jax.experimental import pallas as pl
from jax.experimental.pallas import tpu as pltpu

_EPS = 1e-12


def _df_allpairs_kernel(channels, inv_2np, spec_re_ref, spec_im_ref,
                        cphi_ref, sphi_ref, df_ref):
    # blocks: spec_* (1, C, F, Tt), cphi/sphi (1, C, F, 1), df (1, F, Tt)
    f, tt = df_ref.shape[1], df_ref.shape[2]
    sum_re = jnp.zeros((f, tt), jnp.float32)
    sum_im = jnp.zeros((f, tt), jnp.float32)
    for i in range(channels):
        re = spec_re_ref[0, i]                      # (F, Tt)
        im = spec_im_ref[0, i]
        inv_mag = lax.rsqrt(re * re + im * im + _EPS)
        c = cphi_ref[0, i]                          # (F, 1) -> broadcasts over Tt
        s = sphi_ref[0, i]
        # V_i = (S_i / |S_i|) * (cos(phi_i) + i sin(phi_i))
        sum_re = sum_re + (re * c - im * s) * inv_mag
        sum_im = sum_im + (re * s + im * c) * inv_mag
    # sum_{i<j} Re(V_i conj(V_j)) = (|sum V|^2 - C) / 2   (|V_i| == 1)
    df_ref[0] = (sum_re * sum_re + sum_im * sum_im - float(channels)) * inv_2np


def _df_pairs_kernel(pair_idx, inv_np, spec_re_ref, spec_im_ref,
                     cphi_ref, sphi_ref, df_ref):
    # Fallback for arbitrary pair subsets: normalize/rotate each used channel once,
    # then accumulate Re(V_i conj(V_j)) per pair.
    f, tt = df_ref.shape[1], df_ref.shape[2]
    cache = {}

    def get_v(i):
        if i not in cache:
            re = spec_re_ref[0, i]
            im = spec_im_ref[0, i]
            inv_mag = lax.rsqrt(re * re + im * im + _EPS)
            c = cphi_ref[0, i]
            s = sphi_ref[0, i]
            cache[i] = ((re * c - im * s) * inv_mag, (re * s + im * c) * inv_mag)
        return cache[i]

    acc = jnp.zeros((f, tt), jnp.float32)
    for (i, j) in pair_idx:
        vri, vii = get_v(i)
        vrj, vij = get_v(j)
        acc = acc + (vri * vrj + vii * vij)
    df_ref[0] = acc * inv_np


def df_and_steer_vector(spectrogram, doa, *, array_r, channels, num_bins,
                        pair_idx=None, c=343.0, sr=16000.0):
    """Pallas port of DF_and_SteerVector.forward.

    spectrogram: complex64 (B, C, F, T); doa: float32 (B,) in degrees.
    Returns (df: float32 (B, F, T), steer_vector: complex64 (B, C, F)).
    """
    all_pairs = [(i, j) for i in range(channels) for j in range(i + 1, channels)]
    if pair_idx is None:
        pair_idx = all_pairs
    pair_idx = [tuple(p) for p in pair_idx]
    n_pairs = len(pair_idx)
    use_coherence = (len(pair_idx) == len(all_pairs)
                     and set(pair_idx) == set(all_pairs))

    B, C, F, T = spectrogram.shape
    assert C == channels and F == num_bins

    # ---- tiny parameter setup (plain JAX glue) ----
    topo = jnp.arange(channels, dtype=jnp.float32) * (-1.0 * array_r)           # (C,)
    dist = jnp.cos(doa.astype(jnp.float32)[:, None] * jnp.pi / 180.0) * topo    # (B, C)
    omega = (jnp.pi * jnp.arange(num_bins, dtype=jnp.float32) * sr
             / (num_bins - 1))                                                  # (F,)
    tau = dist / c                                                              # (B, C)
    phi = (tau[:, :, None] * omega[None, None, :]).astype(jnp.float32)          # (B, C, F)
    cos_phi = jnp.cos(phi)
    sin_phi = jnp.sin(phi)
    # steer_vector = exp(-1j * phi) -- computed outside the kernel (tiny, spec-independent)
    steer_vector = lax.complex(cos_phi, -sin_phi).astype(jnp.complex64)         # (B, C, F)

    spec_re = jnp.real(spectrogram).astype(jnp.float32)
    spec_im = jnp.imag(spectrogram).astype(jnp.float32)

    # ---- lane-dense T: pad to a multiple of 128 and tile ----
    t_pad = max(128, ((T + 127) // 128) * 128)
    if t_pad != T:
        pad = [(0, 0), (0, 0), (0, 0), (0, t_pad - T)]
        spec_re = jnp.pad(spec_re, pad)
        spec_im = jnp.pad(spec_im, pad)
    t_tile = 256 if (t_pad % 256 == 0) else 128
    num_t = t_pad // t_tile

    cphi4 = cos_phi[..., None]   # (B, C, F, 1)
    sphi4 = sin_phi[..., None]

    if use_coherence:
        kernel = functools.partial(_df_allpairs_kernel, channels,
                                   1.0 / (2.0 * n_pairs))
    else:
        kernel = functools.partial(_df_pairs_kernel, tuple(pair_idx),
                                   1.0 / n_pairs)

    spec_spec = pl.BlockSpec((1, C, F, t_tile), lambda b, t: (b, 0, 0, t))
    phi_spec = pl.BlockSpec((1, C, F, 1), lambda b, t: (b, 0, 0, 0))
    df_spec = pl.BlockSpec((1, F, t_tile), lambda b, t: (b, 0, t))

    # VMEM budget: double-buffered spec re/im + cos/sin + df block, with headroom.
    f_pad = ((F + 7) // 8) * 8
    per_step_bytes = 4 * (2 * C * f_pad * t_tile + 2 * C * f_pad + f_pad * t_tile)
    vmem_limit = int(min(48 * 1024 * 1024, max(16 * 1024 * 1024, 3 * per_step_bytes)))

    df_padded = pl.pallas_call(
        kernel,
        out_shape=jax.ShapeDtypeStruct((B, F, t_pad), jnp.float32),
        grid=(B, num_t),
        in_specs=[spec_spec, spec_spec, phi_spec, phi_spec],
        out_specs=df_spec,
        compiler_params=pltpu.CompilerParams(
            dimension_semantics=("parallel", "parallel"),
            vmem_limit_bytes=vmem_limit),
    )(spec_re, spec_im, cphi4, sphi4)

    df = df_padded[:, :, :T]
    return df, steer_vector


def _reference(spectrogram, doa, *, array_r, channels, num_bins, pair_idx, c, sr):
    """Direct transcription of the PyTorch forward (plain JAX, for validation)."""
    topo = jnp.arange(channels, dtype=jnp.float32) * (-1.0 * array_r)
    dist = jnp.cos(doa[:, None] * jnp.pi / 180.0) * topo
    omega = jnp.pi * jnp.arange(num_bins, dtype=jnp.float32) * sr / (num_bins - 1)
    tau = (dist / c)[..., None]
    steer = jnp.exp(-1j * (omega * tau)).astype(jnp.complex64)      # (B, C, F)
    arg_s = jnp.angle(spectrogram)
    arg_t = jnp.angle(steer)
    dfs = []
    for i, j in pair_idx:
        delta_s = arg_s[:, i] - arg_s[:, j]
        delta_t = (arg_t[:, i] - arg_t[:, j])[..., None]
        dfs.append(jnp.cos(delta_s - delta_t))
    df = jnp.stack(dfs, axis=-1).mean(axis=-1)
    return df, steer


if __name__ == "__main__":
    B, C, F, T = 2, 4, 17, 16          # batch, mics, freq bins (n_fft//2+1), frames
    array_r = 0.05
    pair_idx = [(i, j) for i in range(C) for j in range(i + 1, C)]

    key = jax.random.PRNGKey(0)
    k1, k2, k3 = jax.random.split(key, 3)
    spec = lax.complex(
        jax.random.normal(k1, (B, C, F, T), jnp.float32),
        jax.random.normal(k2, (B, C, F, T), jnp.float32),
    ).astype(jnp.complex64)
    doa = jax.random.uniform(k3, (B,), jnp.float32, 0.0, 180.0)

    df, steer = df_and_steer_vector(
        spec, doa, array_r=array_r, channels=C, num_bins=F, pair_idx=pair_idx)
    jax.block_until_ready((df, steer))

    df_ref, steer_ref = _reference(
        spec, doa, array_r=array_r, channels=C, num_bins=F,
        pair_idx=pair_idx, c=343.0, sr=16000.0)

    assert df.shape == (B, F, T) and df.dtype == jnp.float32
    assert steer.shape == (B, C, F) and steer.dtype == jnp.complex64
    assert jnp.allclose(df, df_ref, atol=1e-3), "df mismatch vs reference"
    assert jnp.allclose(steer, steer_ref, atol=1e-4), "steer_vector mismatch vs reference"

    print("KERNEL_OK")
</pallas_src>

<mosaic_0001>
module attributes {stable_mosaic.version = 11 : i64} {
  func.func @_df_allpairs_kernel(%arg0: i32, %arg1: i32, %arg2: memref<1x4x17x128xf32, #tpu.memory_space<vmem>>, %arg3: memref<1x4x17x128xf32, #tpu.memory_space<vmem>>, %arg4: memref<1x4x17x1xf32, #tpu.memory_space<vmem>>, %arg5: memref<1x4x17x1xf32, #tpu.memory_space<vmem>>, %arg6: memref<1x17x128xf32, #tpu.memory_space<vmem>>) attributes {dimension_semantics = [#tpu.dimension_semantics<parallel>, #tpu.dimension_semantics<parallel>], iteration_bounds = array<i64: 2, 1>, scalar_prefetch = 0 : i64, scratch_operands = 0 : i64, tpu.core_type = #tpu.core_type<tc>, window_params = [{transform_indices = @transform_0, window_bounds = array<i64: 1, 4, 17, 128>}, {transform_indices = @transform_1, window_bounds = array<i64: 1, 4, 17, 128>}, {transform_indices = @transform_2, window_bounds = array<i64: 1, 4, 17, 1>}, {transform_indices = @transform_3, window_bounds = array<i64: 1, 4, 17, 1>}, {transform_indices = @transform_4, window_bounds = array<i64: 1, 17, 128>}]} {
    %cst = arith.constant 0.000000e+00 : f32
    %0 = vector.broadcast %cst : f32 to vector<17x128xf32>
    %cst_0 = arith.constant 0.000000e+00 : f32
    %1 = vector.broadcast %cst_0 : f32 to vector<17x128xf32>
    %c0 = arith.constant 0 : index
    %c0_1 = arith.constant 0 : index
    %c0_2 = arith.constant 0 : index
    %c0_3 = arith.constant 0 : index
    %2 = vector.load %arg2[%c0, %c0_1, %c0_2, %c0_3] : memref<1x4x17x128xf32, #tpu.memory_space<vmem>>, vector<1x1x17x128xf32>
    %3 = vector.shape_cast %2 : vector<1x1x17x128xf32> to vector<17x128xf32>
    %c0_4 = arith.constant 0 : index
    %c0_5 = arith.constant 0 : index
    %c0_6 = arith.constant 0 : index
    %c0_7 = arith.constant 0 : index
    %4 = vector.load %arg3[%c0_4, %c0_5, %c0_6, %c0_7] : memref<1x4x17x128xf32, #tpu.memory_space<vmem>>, vector<1x1x17x128xf32>
    %5 = vector.shape_cast %4 : vector<1x1x17x128xf32> to vector<17x128xf32>
    %6 = arith.mulf %3, %3 : vector<17x128xf32>
    %7 = arith.mulf %5, %5 : vector<17x128xf32>
    %8 = arith.addf %6, %7 : vector<17x128xf32>
    %cst_8 = arith.constant 9.99999996E-13 : f32
    %9 = vector.broadcast %cst_8 : f32 to vector<17x128xf32>
    %10 = arith.addf %8, %9 : vector<17x128xf32>
    %11 = math.rsqrt %10 : vector<17x128xf32>
    %c0_9 = arith.constant 0 : index
    %c0_10 = arith.constant 0 : index
    %c0_11 = arith.constant 0 : index
    %c0_12 = arith.constant 0 : index
    %12 = vector.load %arg4[%c0_9, %c0_10, %c0_11, %c0_12] : memref<1x4x17x1xf32, #tpu.memory_space<vmem>>, vector<1x1x17x1xf32>
    %13 = vector.shape_cast %12 : vector<1x1x17x1xf32> to vector<17x1xf32>
    %c0_13 = arith.constant 0 : index
    %c0_14 = arith.constant 0 : index
    %c0_15 = arith.constant 0 : index
    %c0_16 = arith.constant 0 : index
    %14 = vector.load %arg5[%c0_13, %c0_14, %c0_15, %c0_16] : memref<1x4x17x1xf32, #tpu.memory_space<vmem>>, vector<1x1x17x1xf32>
    %15 = vector.shape_cast %14 : vector<1x1x17x1xf32> to vector<17x1xf32>
    %16 = vector.broadcast %13 : vector<17x1xf32> to vector<17x128xf32>
    %17 = arith.mulf %3, %16 : vector<17x128xf32>
    %18 = vector.broadcast %15 : vector<17x1xf32> to vector<17x128xf32>
    %19 = arith.mulf %5, %18 : vector<17x128xf32>
    %20 = arith.subf %17, %19 : vector<17x128xf32>
    %21 = arith.mulf %20, %11 : vector<17x128xf32>
    %22 = arith.addf %0, %21 : vector<17x128xf32>
    %23 = vector.broadcast %15 : vector<17x1xf32> to vector<17x128xf32>
    %24 = arith.mulf %3, %23 : vector<17x128xf32>
    %25 = vector.broadcast %13 : vector<17x1xf32> to vector<17x128xf32>
    %26 = arith.mulf %5, %25 : vector<17x128xf32>
    %27 = arith.addf %24, %26 : vector<17x128xf32>
    %28 = arith.mulf %27, %11 : vector<17x128xf32>
    %29 = arith.addf %1, %28 : vector<17x128xf32>
    %c0_17 = arith.constant 0 : index
    %c1 = arith.constant 1 : index
    %c0_18 = arith.constant 0 : index
    %c0_19 = arith.constant 0 : index
    %30 = vector.load %arg2[%c0_17, %c1, %c0_18, %c0_19] : memref<1x4x17x128xf32, #tpu.memory_space<vmem>>, vector<1x1x17x128xf32>
    %31 = vector.shape_cast %30 : vector<1x1x17x128xf32> to vector<17x128xf32>
    %c0_20 = arith.constant 0 : index
    %c1_21 = arith.constant 1 : index
    %c0_22 = arith.constant 0 : index
    %c0_23 = arith.constant 0 : index
    %32 = vector.load %arg3[%c0_20, %c1_21, %c0_22, %c0_23] : memref<1x4x17x128xf32, #tpu.memory_space<vmem>>, vector<1x1x17x128xf32>
    %33 = vector.shape_cast %32 : vector<1x1x17x128xf32> to vector<17x128xf32>
    %34 = arith.mulf %31, %31 : vector<17x128xf32>
    %35 = arith.mulf %33, %33 : vector<17x128xf32>
    %36 = arith.addf %34, %35 : vector<17x128xf32>
    %cst_24 = arith.constant 9.99999996E-13 : f32
    %37 = vector.broadcast %cst_24 : f32 to vector<17x128xf32>
    %38 = arith.addf %36, %37 : vector<17x128xf32>
    %39 = math.rsqrt %38 : vector<17x128xf32>
    %c0_25 = arith.constant 0 : index
    %c1_26 = arith.constant 1 : index
    %c0_27 = arith.constant 0 : index
    %c0_28 = arith.constant 0 : index
    %40 = vector.load %arg4[%c0_25, %c1_26, %c0_27, %c0_28] : memref<1x4x17x1xf32, #tpu.memory_space<vmem>>, vector<1x1x17x1xf32>
    %41 = vector.shape_cast %40 : vector<1x1x17x1xf32> to vector<17x1xf32>
    %c0_29 = arith.constant 0 : index
    %c1_30 = arith.constant 1 : index
    %c0_31 = arith.constant 0 : index
    %c0_32 = arith.constant 0 : index
    %42 = vector.load %arg5[%c0_29, %c1_30, %c0_31, %c0_32] : memref<1x4x17x1xf32, #tpu.memory_space<vmem>>, vector<1x1x17x1xf32>
    %43 = vector.shape_cast %42 : vector<1x1x17x1xf32> to vector<17x1xf32>
    %44 = vector.broadcast %41 : vector<17x1xf32> to vector<17x128xf32>
    %45 = arith.mulf %31, %44 : vector<17x128xf32>
    %46 = vector.broadcast %43 : vector<17x1xf32> to vector<17x128xf32>
    %47 = arith.mulf %33, %46 : vector<17x128xf32>
    %48 = arith.subf %45, %47 : vector<17x128xf32>
    %49 = arith.mulf %48, %39 : vector<17x128xf32>
    %50 = arith.addf %22, %49 : vector<17x128xf32>
    %51 = vector.broadcast %43 : vector<17x1xf32> to vector<17x128xf32>
    %52 = arith.mulf %31, %51 : vector<17x128xf32>
    %53 = vector.broadcast %41 : vector<17x1xf32> to vector<17x128xf32>
    %54 = arith.mulf %33, %53 : vector<17x128xf32>
    %55 = arith.addf %52, %54 : vector<17x128xf32>
    %56 = arith.mulf %55, %39 : vector<17x128xf32>
    %57 = arith.addf %29, %56 : vector<17x128xf32>
    %c0_33 = arith.constant 0 : index
    %c2 = arith.constant 2 : index
    %c0_34 = arith.constant 0 : index
    %c0_35 = arith.constant 0 : index
    %58 = vector.load %arg2[%c0_33, %c2, %c0_34, %c0_35] : memref<1x4x17x128xf32, #tpu.memory_space<vmem>>, vector<1x1x17x128xf32>
    %59 = vector.shape_cast %58 : vector<1x1x17x128xf32> to vector<17x128xf32>
    %c0_36 = arith.constant 0 : index
    %c2_37 = arith.constant 2 : index
    %c0_38 = arith.constant 0 : index
    %c0_39 = arith.constant 0 : index
    %60 = vector.load %arg3[%c0_36, %c2_37, %c0_38, %c0_39] : memref<1x4x17x128xf32, #tpu.memory_space<vmem>>, vector<1x1x17x128xf32>
    %61 = vector.shape_cast %60 : vector<1x1x17x128xf32> to vector<17x128xf32>
    %62 = arith.mulf %59, %59 : vector<17x128xf32>
    %63 = arith.mulf %61, %61 : vector<17x128xf32>
    %64 = arith.addf %62, %63 : vector<17x128xf32>
    %cst_40 = arith.constant 9.99999996E-13 : f32
    %65 = vector.broadcast %cst_40 : f32 to vector<17x128xf32>
    %66 = arith.addf %64, %65 : vector<17x128xf32>
    %67 = math.rsqrt %66 : vector<17x128xf32>
    %c0_41 = arith.constant 0 : index
    %c2_42 = arith.constant 2 : index
    %c0_43 = arith.constant 0 : index
    %c0_44 = arith.constant 0 : index
    %68 = vector.load %arg4[%c0_41, %c2_42, %c0_43, %c0_44] : memref<1x4x17x1xf32, #tpu.memory_space<vmem>>, vector<1x1x17x1xf32>
    %69 = vector.shape_cast %68 : vector<1x1x17x1xf32> to vector<17x1xf32>
    %c0_45 = arith.constant 0 : index
    %c2_46 = arith.constant 2 : index
    %c0_47 = arith.constant 0 : index
    %c0_48 = arith.constant 0 : index
    %70 = vector.load %arg5[%c0_45, %c2_46, %c0_47, %c0_48] : memref<1x4x17x1xf32, #tpu.memory_space<vmem>>, vector<1x1x17x1xf32>
    %71 = vector.shape_cast %70 : vector<1x1x17x1xf32> to vector<17x1xf32>
    %72 = vector.broadcast %69 : vector<17x1xf32> to vector<17x128xf32>
    %73 = arith.mulf %59, %72 : vector<17x128xf32>
    %74 = vector.broadcast %71 : vector<17x1xf32> to vector<17x128xf32>
    %75 = arith.mulf %61, %74 : vector<17x128xf32>
    %76 = arith.subf %73, %75 : vector<17x128xf32>
    %77 = arith.mulf %76, %67 : vector<17x128xf32>
    %78 = arith.addf %50, %77 : vector<17x128xf32>
    %79 = vector.broadcast %71 : vector<17x1xf32> to vector<17x128xf32>
    %80 = arith.mulf %59, %79 : vector<17x128xf32>
    %81 = vector.broadcast %69 : vector<17x1xf32> to vector<17x128xf32>
    %82 = arith.mulf %61, %81 : vector<17x128xf32>
    %83 = arith.addf %80, %82 : vector<17x128xf32>
    %84 = arith.mulf %83, %67 : vector<17x128xf32>
    %85 = arith.addf %57, %84 : vector<17x128xf32>
    %c0_49 = arith.constant 0 : index
    %c3 = arith.constant 3 : index
    %c0_50 = arith.constant 0 : index
    %c0_51 = arith.constant 0 : index
    %86 = vector.load %arg2[%c0_49, %c3, %c0_50, %c0_51] : memref<1x4x17x128xf32, #tpu.memory_space<vmem>>, vector<1x1x17x128xf32>
    %87 = vector.shape_cast %86 : vector<1x1x17x128xf32> to vector<17x128xf32>
    %c0_52 = arith.constant 0 : index
    %c3_53 = arith.constant 3 : index
    %c0_54 = arith.constant 0 : index
    %c0_55 = arith.constant 0 : index
    %88 = vector.load %arg3[%c0_52, %c3_53, %c0_54, %c0_55] : memref<1x4x17x128xf32, #tpu.memory_space<vmem>>, vector<1x1x17x128xf32>
    %89 = vector.shape_cast %88 : vector<1x1x17x128xf32> to vector<17x128xf32>
    %90 = arith.mulf %87, %87 : vector<17x128xf32>
    %91 = arith.mulf %89, %89 : vector<17x128xf32>
    %92 = arith.addf %90, %91 : vector<17x128xf32>
    %cst_56 = arith.constant 9.99999996E-13 : f32
    %93 = vector.broadcast %cst_56 : f32 to vector<17x128xf32>
    %94 = arith.addf %92, %93 : vector<17x128xf32>
    %95 = math.rsqrt %94 : vector<17x128xf32>
    %c0_57 = arith.constant 0 : index
    %c3_58 = arith.constant 3 : index
    %c0_59 = arith.constant 0 : index
    %c0_60 = arith.constant 0 : index
    %96 = vector.load %arg4[%c0_57, %c3_58, %c0_59, %c0_60] : memref<1x4x17x1xf32, #tpu.memory_space<vmem>>, vector<1x1x17x1xf32>
    %97 = vector.shape_cast %96 : vector<1x1x17x1xf32> to vector<17x1xf32>
    %c0_61 = arith.constant 0 : index
    %c3_62 = arith.constant 3 : index
    %c0_63 = arith.constant 0 : index
    %c0_64 = arith.constant 0 : index
    %98 = vector.load %arg5[%c0_61, %c3_62, %c0_63, %c0_64] : memref<1x4x17x1xf32, #tpu.memory_space<vmem>>, vector<1x1x17x1xf32>
    %99 = vector.shape_cast %98 : vector<1x1x17x1xf32> to vector<17x1xf32>
    %100 = vector.broadcast %97 : vector<17x1xf32> to vector<17x128xf32>
    %101 = arith.mulf %87, %100 : vector<17x128xf32>
    %102 = vector.broadcast %99 : vector<17x1xf32> to vector<17x128xf32>
    %103 = arith.mulf %89, %102 : vector<17x128xf32>
    %104 = arith.subf %101, %103 : vector<17x128xf32>
    %105 = arith.mulf %104, %95 : vector<17x128xf32>
    %106 = arith.addf %78, %105 : vector<17x128xf32>
    %107 = vector.broadcast %99 : vector<17x1xf32> to vector<17x128xf32>
    %108 = arith.mulf %87, %107 : vector<17x128xf32>
    %109 = vector.broadcast %97 : vector<17x1xf32> to vector<17x128xf32>
    %110 = arith.mulf %89, %109 : vector<17x128xf32>
    %111 = arith.addf %108, %110 : vector<17x128xf32>
    %112 = arith.mulf %111, %95 : vector<17x128xf32>
    %113 = arith.addf %85, %112 : vector<17x128xf32>
    %114 = arith.mulf %106, %106 : vector<17x128xf32>
    %115 = arith.mulf %113, %113 : vector<17x128xf32>
    %116 = arith.addf %114, %115 : vector<17x128xf32>
    %cst_65 = arith.constant 4.000000e+00 : f32
    %117 = vector.broadcast %cst_65 : f32 to vector<17x128xf32>
    %118 = arith.subf %116, %117 : vector<17x128xf32>
    %cst_66 = arith.constant 0.0833333358 : f32
    %119 = vector.broadcast %cst_66 : f32 to vector<17x128xf32>
    %120 = arith.mulf %118, %119 : vector<17x128xf32>
    %c0_67 = arith.constant 0 : index
    %c0_68 = arith.constant 0 : index
    %c0_69 = arith.constant 0 : index
    %121 = vector.load %arg6[%c0_67, %c0_68, %c0_69] : memref<1x17x128xf32, #tpu.memory_space<vmem>>, vector<1x17x128xf32>
    %122 = vector.shape_cast %121 : vector<1x17x128xf32> to vector<17x128xf32>
    %123 = vector.shape_cast %120 : vector<17x128xf32> to vector<1x17x128xf32>
    tpu.vector_store %arg6[%c0_67, %c0_68, %c0_69], %123 {strides = array<i32>} : memref<1x17x128xf32, #tpu.memory_space<vmem>>, vector<1x17x128xf32>,
    return
  }
  func.func @transform_0(%arg0: i32, %arg1: i32) -> (i32, i32, i32, i32) {
    %c0_i32 = arith.constant 0 : i32
    %c0_i32_0 = arith.constant 0 : i32
    %c0_i32_1 = arith.constant 0 : i32
    return %arg0, %c0_i32, %c0_i32_0, %arg1 : i32, i32, i32, i32
  }
  func.func @transform_1(%arg0: i32, %arg1: i32) -> (i32, i32, i32, i32) {
    %c0_i32 = arith.constant 0 : i32
    %c0_i32_0 = arith.constant 0 : i32
    %c0_i32_1 = arith.constant 0 : i32
    return %arg0, %c0_i32, %c0_i32_0, %arg1 : i32, i32, i32, i32
  }
  func.func @transform_2(%arg0: i32, %arg1: i32) -> (i32, i32, i32, i32) {
    %c0_i32 = arith.constant 0 : i32
    %c0_i32_0 = arith.constant 0 : i32
    %c0_i32_1 = arith.constant 0 : i32
    %c0_i32_2 = arith.constant 0 : i32
    return %arg0, %c0_i32, %c0_i32_0, %c0_i32_1 : i32, i32, i32, i32
  }
  func.func @transform_3(%arg0: i32, %arg1: i32) -> (i32, i32, i32, i32) {
    %c0_i32 = arith.constant 0 : i32
    %c0_i32_0 = arith.constant 0 : i32
    %c0_i32_1 = arith.constant 0 : i32
    %c0_i32_2 = arith.constant 0 : i32
    return %arg0, %c0_i32, %c0_i32_0, %c0_i32_1 : i32, i32, i32, i32
  }
  func.func @transform_4(%arg0: i32, %arg1: i32) -> (i32, i32, i32) {
    %c0_i32 = arith.constant 0 : i32
    %c0_i32_0 = arith.constant 0 : i32
    return %arg0, %c0_i32, %arg1 : i32, i32, i32
  }
}

</mosaic_0001>

<llo_original>
// kernel: tpu_custom_call.1
$region0: #{tpu_custom_call.1}
  #allocation0 [shape = 'u32[]', space=smem, size = 0x4, offset = 0x4, fixed_abs, tag = 'smem constant byte address 0x4 - core index']
  #allocation1 [shape = 'u32[72,128]{1,0:T(1,128)}', space=vmem, size = 0x9000, scoped, tag = 'internal scratch']
  %s0 = inlined_call_operand.vmem [shape: f32[2,4,17,128], index: 0, kind: input, shape index: {}]
  %s1 = inlined_call_operand.vmem [shape: f32[2,4,17,128], index: 1, kind: input, shape index: {}]
  %s2 = inlined_call_operand.vmem [shape: f32[2,4,17,1], index: 2, kind: input, shape index: {}]
  %s3 = inlined_call_operand.vmem [shape: f32[2,4,17,1], index: 3, kind: input, shape index: {}]
  %s4 = inlined_call_operand.vmem [shape: f32[2,17,128], index: 4, kind: output, shape index: {}]
  %s5 = sld [smem:[#allocation0]]
  $region49: #{tpu_custom_call.1} parent=0
    _
  %s7 = ssub.s32 1, %s5
  %s8 = scalar_select 0, %s7, %s5
  loop: start=0, step=1, limit=4
  $region2: #{tpu_custom_call.1} parent=0 // loop_pre_header
    _
  $region3: #{tpu_custom_call.1} parent=0 // loop_header
    %s10 = sphi 0, %s14
    %p11 = scmp.ge.s32.totalorder %s10, 4
    %s17 = sphi 0, %s29
    %s18 = sphi 0, %s25
    %s19 = sphi 0, %s17
    %s20 = sphi 0, %s18
    %s21 = sphi 0, %s19
    %s22 = sphi 0, %s20
    %s34 = sphi 0, %s36
    %s37 = sphi 0, %s34
    %s38 = sphi 0, %s37
    %s54 = sphi 0, %s38
    %s62 = sphi 0, %s64
    %s65 = sphi 0, %s62
    %s66 = sphi 0, %s65
    %s82 = sphi 0, %s66
    %s88 = sphi 0, %s90
    %s91 = sphi 0, %s88
    %s92 = sphi 0, %s91
    %s108 = sphi 0, %s92
    %s114 = sphi 0, %s116
    %s117 = sphi 0, %s114
    %s118 = sphi 0, %s117
    %s134 = sphi 0, %s118
    %s142 = sphi 0, %s144
    %s145 = sphi 0, %s142
    %s146 = sphi 0, %s145
    %s162 = sphi 0, %s146
  $region4: #{tpu_custom_call.1} parent=0 // loop_header_branch
    %13 = sbr.rel (%p11) target = $region8
  $region5: #{tpu_custom_call.1} parent=0 // loop_body
    %s15 = ssub.s32 %s10, 1
    %s16 = ssub.s32 %s10, 2
    %s23 = sadd.s32 1, %s18
    %p24 = scmp.ge.s32.totalorder %s23, 1
    %s25 = scalar_select %p24, 0, %s23
    %s26 = sadd.s32 1, %s17
    %s27 = scalar_select %p24, %s26, %s17
    %p28 = scmp.ge.s32.totalorder %s27, 2
    %s29 = scalar_select %p28, 0, %s27
    %s30 = ssub.s32 %s17, %s29
    %s31 = ssub.s32 %s18, %s25
    %s32 = sor.u32 %s30, %s31
    %p33 = scmp.eq.s32.totalorder %s32, 0
    %s35 = sadd.s32 %s34, 1
    %s36 = scalar_select %p33, %s34, %s35
    %p39 = pneg %p33
    %p40 = scmp.eq.s32.totalorder %s10, 1
    %p41 = por %p39, %p40
    %p42 = scmp.ne.s32.totalorder %s34, %s37
    %p43 = scmp.eq.s32.totalorder %s10, 0
    %p44 = por %p42, %p43
    %p45 = scmp.ne.s32.totalorder %s34, %s37
    %p46 = scmp.eq.s32.totalorder %s15, 1
    %p47 = por %p45, %p46
    %p48 = scmp.ne.s32.totalorder %s37, %s38
    %p49 = scmp.eq.s32.totalorder %s15, 0
    %p50 = por %p48, %p49
    %p51 = scmp.ne.s32.totalorder %s37, %s38
    %p52 = scmp.eq.s32.totalorder %s16, 1
    %p53 = por %p51, %p52
    %p55 = scmp.ne.s32.totalorder %s38, %s54
    %p56 = scmp.eq.s32.totalorder %s16, 0
    %p57 = por %p55, %p56
    %s58 = ssub.s32 %s17, %s29
    %s59 = ssub.s32 %s18, %s25
    %s60 = sor.u32 %s58, %s59
    %p61 = scmp.eq.s32.totalorder %s60, 0
    %s63 = sadd.s32 %s62, 1
    %s64 = scalar_select %p61, %s62, %s63
    %p67 = pneg %p61
    %p68 = scmp.eq.s32.totalorder %s10, 1
    %p69 = por %p67, %p68
    %p70 = scmp.ne.s32.totalorder %s62, %s65
    %p71 = scmp.eq.s32.totalorder %s10, 0
    %p72 = por %p70, %p71
    %p73 = scmp.ne.s32.totalorder %s62, %s65
    %p74 = scmp.eq.s32.totalorder %s15, 1
    %p75 = por %p73, %p74
    %p76 = scmp.ne.s32.totalorder %s65, %s66
    %p77 = scmp.eq.s32.totalorder %s15, 0
    %p78 = por %p76, %p77
    %p79 = scmp.ne.s32.totalorder %s65, %s66
    %p80 = scmp.eq.s32.totalorder %s16, 1
    %p81 = por %p79, %p80
    %p83 = scmp.ne.s32.totalorder %s66, %s82
    %p84 = scmp.eq.s32.totalorder %s16, 0
    %p85 = por %p83, %p84
    %s86 = ssub.s32 %s17, %s29
    %p87 = scmp.eq.s32.totalorder %s86, 0
    %s89 = sadd.s32 %s88, 1
    %s90 = scalar_select %p87, %s88, %s89
    %p93 = pneg %p87
    %p94 = scmp.eq.s32.totalorder %s10, 1
    %p95 = por %p93, %p94
    %p96 = scmp.ne.s32.totalorder %s88, %s91
    %p97 = scmp.eq.s32.totalorder %s10, 0
    %p98 = por %p96, %p97
    %p99 = scmp.ne.s32.totalorder %s88, %s91
    %p100 = scmp.eq.s32.totalorder %s15, 1
    %p101 = por %p99, %p100
    %p102 = scmp.ne.s32.totalorder %s91, %s92
    %p103 = scmp.eq.s32.totalorder %s15, 0
    %p104 = por %p102, %p103
    %p105 = scmp.ne.s32.totalorder %s91, %s92
    %p106 = scmp.eq.s32.totalorder %s16, 1
    %p107 = por %p105, %p106
    %p109 = scmp.ne.s32.totalorder %s92, %s108
    %p110 = scmp.eq.s32.totalorder %s16, 0
    %p111 = por %p109, %p110
    %s112 = ssub.s32 %s17, %s29
    %p113 = scmp.eq.s32.totalorder %s112, 0
    %s115 = sadd.s32 %s114, 1
    %s116 = scalar_select %p113, %s114, %s115
    %p119 = pneg %p113
    %p120 = scmp.eq.s32.totalorder %s10, 1
    %p121 = por %p119, %p120
    %p122 = scmp.ne.s32.totalorder %s114, %s117
    %p123 = scmp.eq.s32.totalorder %s10, 0
    %p124 = por %p122, %p123
    %p125 = scmp.ne.s32.totalorder %s114, %s117
    %p126 = scmp.eq.s32.totalorder %s15, 1
    %p127 = por %p125, %p126
    %p128 = scmp.ne.s32.totalorder %s117, %s118
    %p129 = scmp.eq.s32.totalorder %s15, 0
    %p130 = por %p128, %p129
    %p131 = scmp.ne.s32.totalorder %s117, %s118
    %p132 = scmp.eq.s32.totalorder %s16, 1
    %p133 = por %p131, %p132
    %p135 = scmp.ne.s32.totalorder %s118, %s134
    %p136 = scmp.eq.s32.totalorder %s16, 0
    %p137 = por %p135, %p136
    %s138 = ssub.s32 %s17, %s29
    %s139 = ssub.s32 %s18, %s25
    %s140 = sor.u32 %s138, %s139
    %p141 = scmp.eq.s32.totalorder %s140, 0
    %s143 = sadd.s32 %s142, 1
    %s144 = scalar_select %p141, %s142, %s143
    %p147 = pneg %p141
    %p148 = scmp.eq.s32.totalorder %s10, 1
    %p149 = por %p147, %p148
    %p150 = scmp.ne.s32.totalorder %s142, %s145
    %p151 = scmp.eq.s32.totalorder %s10, 0
    %p152 = por %p150, %p151
    %p153 = scmp.ne.s32.totalorder %s142, %s145
    %p154 = scmp.eq.s32.totalorder %s15, 1
    %p155 = por %p153, %p154
    %p156 = scmp.ne.s32.totalorder %s145, %s146
    %p157 = scmp.eq.s32.totalorder %s15, 0
    %p158 = por %p156, %p157
    %p159 = scmp.ne.s32.totalorder %s145, %s146
    %p160 = scmp.eq.s32.totalorder %s16, 1
    %p161 = por %p159, %p160
    %p163 = scmp.ne.s32.totalorder %s146, %s162
    %p164 = scmp.eq.s32.totalorder %s16, 0
    %p165 = por %p163, %p164
    %p166 = scmp.le.s32.totalorder 1, %s10
    %p167 = scmp.lt.s32.totalorder %s10, 3
    %p168 = pnand %p166, %p167
    %p169 = pneg %p168
    // Predicated region
    $region9: #{tpu_custom_call.1} parent=5 // pred_check
      _
    $region10: #{tpu_custom_call.1} parent=5 // pred_check_branch
      %171 = sbr.rel (%p168) target = $region12
    $region11: #{tpu_custom_call.1} parent=5 // pred_region
      %s172 = ssub.s32 %s10, 1
    $region12: #{tpu_custom_call.1} parent=5 // pred_fallthru
      _
    %p173 = scmp.lt.s32.totalorder %s10, 2
    // Predicated region
    $region13: #{tpu_custom_call.1} parent=5 // pred_check
      %p174 = pneg %p173
    $region14: #{tpu_custom_call.1} parent=5 // pred_check_branch
      %176 = sbr.rel (%p174) target = $region16
    $region15: #{tpu_custom_call.1} parent=5 // pred_region
      // Predicated region
      $region17: #{tpu_custom_call.1} parent=15 // pred_check
        %p177 = pneg %p44
      $region18: #{tpu_custom_call.1} parent=15 // pred_check_branch
        %179 = sbr.rel (%p177) target = $region20
      $region19: #{tpu_custom_call.1} parent=15 // pred_region
        %p180 = scmp.lt.s32.totalorder %s17, 1
        %s181 = scalar_select %p180, %s17, 1
        %p182 = scmp.lt.s32.totalorder %s18, 0
        %s183 = scalar_select %p182, %s18, 0
        %s184 = smul.addr %s181, 12
        %s185 = sadd.s32 %s183, %s184
        %s186 = smul.addr %s185, 8
        %s187 = scalar_lea.vmem %s0, %s186
      $region20: #{tpu_custom_call.1} parent=15 // pred_fallthru
        _
      // Predicated region
      $region21: #{tpu_custom_call.1} parent=15 // pred_check
        %p188 = pneg %p72
      $region22: #{tpu_custom_call.1} parent=15 // pred_check_branch
        %190 = sbr.rel (%p188) target = $region24
      $region23: #{tpu_custom_call.1} parent=15 // pred_region
        %p191 = scmp.lt.s32.totalorder %s17, 1
        %s192 = scalar_select %p191, %s17, 1
        %p193 = scmp.lt.s32.totalorder %s18, 0
        %s194 = scalar_select %p193, %s18, 0
        %s195 = smul.addr %s192, 12
        %s196 = sadd.s32 %s194, %s195
        %s197 = smul.addr %s196, 8
        %s198 = scalar_lea.vmem %s1, %s197
      $region24: #{tpu_custom_call.1} parent=15 // pred_fallthru
        _
      // Predicated region
      $region25: #{tpu_custom_call.1} parent=15 // pred_check
        %p199 = pneg %p98
      $region26: #{tpu_custom_call.1} parent=15 // pred_check_branch
        %201 = sbr.rel (%p199) target = $region28
      $region27: #{tpu_custom_call.1} parent=15 // pred_region
        %p202 = scmp.lt.s32.totalorder %s17, 1
        %s203 = scalar_select %p202, %s17, 1
        %s204 = smul.addr %s203, 12
        %s205 = smul.addr %s204, 8
        %s206 = scalar_lea.vmem %s2, %s205
      $region28: #{tpu_custom_call.1} parent=15 // pred_fallthru
        _
      // Predicated region
      $region29: #{tpu_custom_call.1} parent=15 // pred_check
        %p207 = pneg %p124
      $region30: #{tpu_custom_call.1} parent=15 // pred_check_branch
        %209 = sbr.rel (%p207) target = $region32
      $region31: #{tpu_custom_call.1} parent=15 // pred_region
        %p210 = scmp.lt.s32.totalorder %s17, 1
        %s211 = scalar_select %p210, %s17, 1
        %s212 = smul.addr %s211, 12
        %s213 = smul.addr %s212, 8
        %s214 = scalar_lea.vmem %s3, %s213
      $region32: #{tpu_custom_call.1} parent=15 // pred_fallthru
        _
    $region16: #{tpu_custom_call.1} parent=5 // pred_fallthru
      _
    %p215 = scmp.le.s32.totalorder 1, %s10
    %p216 = scmp.lt.s32.totalorder %s10, 3
    %p217 = pnand %p215, %p216
    %p218 = pneg %p217
    // Predicated region
    $region33: #{tpu_custom_call.1} parent=5 // pred_check
      _
    $region34: #{tpu_custom_call.1} parent=5 // pred_check_branch
      %220 = sbr.rel (%p217) target = $region36
    $region35: #{tpu_custom_call.1} parent=5 // pred_region
      %s221 = ssub.s32 %s10, 1
      %p222 = scmp.lt.s32.totalorder %s19, 1
      %s223 = scalar_select %p222, %s19, 1
      %p224 = scmp.lt.s32.totalorder %s20, 0
      %s225 = scalar_select %p224, %s20, 0
      %s226 = smul.addr %s223, 12
      %s227 = sadd.s32 %s225, %s226
      %s228 = smul.addr %s227, 8
      %s229 = scalar_lea.vmem %s0, %s228
      %p230 = pneg %p50
      %p231 = pneg %p47
      %p232 = scmp.lt.s32.totalorder %s19, 1
      %s233 = scalar_select %p232, %s19, 1
      %p234 = scmp.lt.s32.totalorder %s20, 0
      %s235 = scalar_select %p234, %s20, 0
      %s236 = smul.addr %s233, 12
      %s237 = sadd.s32 %s235, %s236
      %s238 = smul.addr %s237, 8
      %s239 = scalar_lea.vmem %s1, %s238
      %p240 = pneg %p78
      %p241 = pneg %p75
      %p242 = scmp.lt.s32.totalorder %s19, 1
      %s243 = scalar_select %p242, %s19, 1
      %s244 = smul.addr %s243, 12
      %s245 = smul.addr %s244, 8
      %s246 = scalar_lea.vmem %s2, %s245
      %p247 = pneg %p104
      %p248 = pneg %p101
      %p249 = scmp.lt.s32.totalorder %s19, 1
      %s250 = scalar_select %p249, %s19, 1
      %s251 = smul.addr %s250, 12
      %s252 = smul.addr %s251, 8
      %s253 = scalar_lea.vmem %s3, %s252
      %p254 = pneg %p130
      %p255 = pneg %p127
      %p256 = pneg %p158
      %p257 = pneg %p155
      %p258 = scmp.lt.s32.totalorder %s19, 1
      %s259 = scalar_select %p258, %s19, 1
      %p260 = scmp.lt.s32.totalorder %s20, 0
      %s261 = scalar_select %p260, %s20, 0
      %s262 = smul.addr %s259, 3
      %s263 = sadd.s32 %s261, %s262
      %s264 = smul.addr %s263, 8
      %s265 = scalar_lea.vmem %s4, %s264
      %p266 = scmp.lt.s32.totalorder %s19, 1
      %s267 = scalar_select %p266, %s19, 1
      %p268 = scmp.lt.s32.totalorder %s20, 0
      %s269 = scalar_select %p268, %s20, 0
      %s270 = smul.addr %s267, 12
      %s271 = sadd.s32 %s269, %s270
      %s272 = smul.addr %s271, 8
      %s273 = scalar_lea.vmem %s0, %s272
      %p274 = scmp.lt.s32.totalorder %s19, 1
      %s275 = scalar_select %p274, %s19, 1
      %p276 = scmp.lt.s32.totalorder %s20, 0
      %s277 = scalar_select %p276, %s20, 0
      %s278 = smul.addr %s275, 12
      %s279 = sadd.s32 %s277, %s278
      %s280 = smul.addr %s279, 8
      %s281 = scalar_lea.vmem %s1, %s280
      %p282 = scmp.lt.s32.totalorder %s19, 1
      %s283 = scalar_select %p282, %s19, 1
      %s284 = smul.addr %s283, 12
      %s285 = smul.addr %s284, 8
      %s286 = scalar_lea.vmem %s2, %s285
      %p287 = scmp.lt.s32.totalorder %s19, 1
      %s288 = scalar_select %p287, %s19, 1
      %s289 = smul.addr %s288, 12
      %s290 = smul.addr %s289, 8
      %s291 = scalar_lea.vmem %s3, %s290
      %p292 = scmp.lt.s32.totalorder %s19, 1
      %s293 = scalar_select %p292, %s19, 1
      %p294 = scmp.lt.s32.totalorder %s20, 0
      %s295 = scalar_select %p294, %s20, 0
      %s296 = smul.addr %s293, 3
      %s297 = sadd.s32 %s295, %s296
      %s298 = smul.addr %s297, 8
      %s299 = scalar_lea.vmem %s4, %s298
      %v300 = vld [vmem:[%s273] sm:$0xff]
      %v301 = vld [vmem:[%s273 + $0x8] sm:$0xff]
      %v302 = vld [vmem:[%s273 + $0x10] sm:$0x1]
      %v303 = vld [vmem:[%s281] sm:$0xff]
      %v304 = vld [vmem:[%s281 + $0x8] sm:$0xff]
      %v305 = vld [vmem:[%s281 + $0x10] sm:$0x1]
      %v306 = vmul.f32 %v300, %v300
      %v307 = vmul.f32 %v301, %v301
      %v308 = vmul.f32 %v302, %v302
      %v309 = vmul.f32 %v303, %v303
      %v310 = vmul.f32 %v304, %v304
      %v311 = vmul.f32 %v305, %v305
      %v312 = vadd.f32 %v306, %v309
      %v313 = vadd.f32 %v307, %v310
      %v314 = vadd.f32 %v308, %v311
      %v315 = vadd.f32 %v312, 1e-12
      %v316 = vadd.f32 %v313, 1e-12
      %v317 = vadd.f32 %v314, 1e-12
      %v318 = vrsqrt.pop %v315
      %v319 = vmul.f32 %v318, %v315
      %v320 = vmul.f32 %v319, %v318
      %v321 = vmul.f32 0.5, %v320
      %v322 = vsub.f32 1.5, %v321
      %v323 = vmul.f32 %v318, %v322
      %vm324 = vweird.f32 %v315
      %vm325 = vweird.f32 %v318
      %vm326 = vmor %vm324, %vm325
      %v327 = vsel %vm326, %v318, %v323
      %v328 = vrsqrt.pop %v316
      %v329 = vmul.f32 %v328, %v316
      %v330 = vmul.f32 %v329, %v328
      %v331 = vmul.f32 0.5, %v330
      %v332 = vsub.f32 1.5, %v331
      %v333 = vmul.f32 %v328, %v332
      %vm334 = vweird.f32 %v316
      %vm335 = vweird.f32 %v328
      %vm336 = vmor %vm334, %vm335
      %v337 = vsel %vm336, %v328, %v333
      %v338 = vrsqrt.pop %v317
      %v339 = vmul.f32 %v338, %v317
      %v340 = vmul.f32 %v339, %v338
      %v341 = vmul.f32 0.5, %v340
      %v342 = vsub.f32 1.5, %v341
      %v343 = vmul.f32 %v338, %v342
      %vm344 = vweird.f32 %v317
      %vm345 = vweird.f32 %v338
      %vm346 = vmor %vm344, %vm345
      %v347 = vsel %vm346, %v338, %v343
      %v348 = vld [vmem:[%s286] sm:$0xff]
      %v349 = vld [vmem:[%s286 + $0x8] sm:$0xff]
      %v350 = vld [vmem:[%s286 + $0x10] sm:$0x1]
      %v351 = vld [vmem:[%s291] sm:$0xff]
      %v352 = vld [vmem:[%s291 + $0x8] sm:$0xff]
      %v353 = vld [vmem:[%s291 + $0x10] sm:$0x1]
      %355 = vset.pattern.permute.xlu0 0
      %356 = vperm.xlu0 %355, %v348
      %v357 = vpop.permute.xlu0 %356
      %360 = vset.pattern.permute.xlu0 0
      %361 = vperm.xlu0 %360, %v349
      %v362 = vpop.permute.xlu0 %361
      %365 = vset.pattern.permute.xlu0 0
      %366 = vperm.xlu0 %365, %v350
      %v367 = vpop.permute.xlu0 %366
      %v369 = vmul.f32 %v300, %v357
      %v370 = vmul.f32 %v301, %v362
      %v371 = vmul.f32 %v302, %v367
      %373 = vset.pattern.permute.xlu0 0
      %374 = vperm.xlu0 %373, %v351
      %v375 = vpop.permute.xlu0 %374
      %378 = vset.pattern.permute.xlu0 0
      %379 = vperm.xlu0 %378, %v352
      %v380 = vpop.permute.xlu0 %379
      %383 = vset.pattern.permute.xlu0 0
      %384 = vperm.xlu0 %383, %v353
      %v385 = vpop.permute.xlu0 %384
      %v387 = vmul.f32 %v303, %v375
      %v388 = vmul.f32 %v304, %v380
      %v389 = vmul.f32 %v305, %v385
      %v390 = vsub.f32 %v369, %v387
      %v391 = vsub.f32 %v370, %v388
      %v392 = vsub.f32 %v371, %v389
      %v393 = vmul.f32 %v390, %v327
      %v394 = vmul.f32 %v391, %v337
      %v395 = vmul.f32 %v392, %v347
      %v396 = vadd.f32 %v393, 0.0
      %v397 = vadd.f32 %v394, 0.0
      %v398 = vadd.f32 %v395, 0.0
      %v399 = vmul.f32 %v300, %v375
      %v400 = vmul.f32 %v301, %v380
      %v401 = vmul.f32 %v302, %v385
      %v402 = vmul.f32 %v303, %v357
      %v403 = vmul.f32 %v304, %v362
      %v404 = vmul.f32 %v305, %v367
      %v405 = vadd.f32 %v399, %v402
      %v406 = vadd.f32 %v400, %v403
      %v407 = vadd.f32 %v401, %v404
      %v408 = vmul.f32 %v405, %v327
      %v409 = vmul.f32 %v406, %v337
      %v410 = vmul.f32 %v407, %v347
      %v411 = vadd.f32 %v408, 0.0
      %v412 = vadd.f32 %v409, 0.0
      %v413 = vadd.f32 %v410, 0.0
      %s414 = scalar_lea.vmem %s273, 24
      %v415 = vld [vmem:[%s414] sm:$0xff]
      %v416 = vld [vmem:[%s414 + $0x8] sm:$0xff]
      %v417 = vld [vmem:[%s414 + $0x10] sm:$0x1]
      %s418 = scalar_lea.vmem %s281, 24
      %v419 = vld [vmem:[%s418] sm:$0xff]
      %v420 = vld [vmem:[%s418 + $0x8] sm:$0xff]
      %v421 = vld [vmem:[%s418 + $0x10] sm:$0x1]
      %v422 = vmul.f32 %v415, %v415
      %v423 = vmul.f32 %v416, %v416
      %v424 = vmul.f32 %v417, %v417
      %v425 = vmul.f32 %v419, %v419
      %v426 = vmul.f32 %v420, %v420
      %v427 = vmul.f32 %v421, %v421
      %v428 = vadd.f32 %v422, %v425
      %v429 = vadd.f32 %v423, %v426
      %v430 = vadd.f32 %v424, %v427
      %v431 = vadd.f32 %v428, 1e-12
      %v432 = vadd.f32 %v429, 1e-12
      %v433 = vadd.f32 %v430, 1e-12
      %v434 = vrsqrt.pop %v431
      %v435 = vmul.f32 %v434, %v431
      %v436 = vmul.f32 %v435, %v434
      %v437 = vmul.f32 0.5, %v436
      %v438 = vsub.f32 1.5, %v437
      %v439 = vmul.f32 %v434, %v438
      %vm440 = vweird.f32 %v431
      %vm441 = vweird.f32 %v434
      %vm442 = vmor %vm440, %vm441
      %v443 = vsel %vm442, %v434, %v439
      %v444 = vrsqrt.pop %v432
      %v445 = vmul.f32 %v444, %v432
      %v446 = vmul.f32 %v445, %v444
      %v447 = vmul.f32 0.5, %v446
      %v448 = vsub.f32 1.5, %v447
      %v449 = vmul.f32 %v444, %v448
      %vm450 = vweird.f32 %v432
      %vm451 = vweird.f32 %v444
      %vm452 = vmor %vm450, %vm451
      %v453 = vsel %vm452, %v444, %v449
      %v454 = vrsqrt.pop %v433
      %v455 = vmul.f32 %v454, %v433
      %v456 = vmul.f32 %v455, %v454
      %v457 = vmul.f32 0.5, %v456
      %v458 = vsub.f32 1.5, %v457
      %v459 = vmul.f32 %v454, %v458
      %vm460 = vweird.f32 %v433
      %vm461 = vweird.f32 %v454
      %vm462 = vmor %vm460, %vm461
      %v463 = vsel %vm462, %v454, %v459
      %s464 = scalar_lea.vmem %s286, 24
      %v465 = vld [vmem:[%s464] sm:$0xff]
      %v466 = vld [vmem:[%s464 + $0x8] sm:$0xff]
      %v467 = vld [vmem:[%s464 + $0x10] sm:$0x1]
      %s468 = scalar_lea.vmem %s291, 24
      %v469 = vld [vmem:[%s468] sm:$0xff]
      %v470 = vld [vmem:[%s468 + $0x8] sm:$0xff]
      %v471 = vld [vmem:[%s468 + $0x10] sm:$0x1]
      %473 = vset.pattern.permute.xlu0 0
      %474 = vperm.xlu0 %473, %v465
      %v475 = vpop.permute.xlu0 %474
      %478 = vset.pattern.permute.xlu0 0
      %479 = vperm.xlu0 %478, %v466
      %v480 = vpop.permute.xlu0 %479
      %483 = vset.pattern.permute.xlu0 0
      %484 = vperm.xlu0 %483, %v467
      %v485 = vpop.permute.xlu0 %484
      %v487 = vmul.f32 %v415, %v475
      %v488 = vmul.f32 %v416, %v480
      %v489 = vmul.f32 %v417, %v485
      %491 = vset.pattern.permute.xlu0 0
      %492 = vperm.xlu0 %491, %v469
      %v493 = vpop.permute.xlu0 %492
      %496 = vset.pattern.permute.xlu0 0
      %497 = vperm.xlu0 %496, %v470
      %v498 = vpop.permute.xlu0 %497
      %501 = vset.pattern.permute.xlu0 0
      %502 = vperm.xlu0 %501, %v471
      %v503 = vpop.permute.xlu0 %502
      %v505 = vmul.f32 %v419, %v493
      %v506 = vmul.f32 %v420, %v498
      %v507 = vmul.f32 %v421, %v503
      %v508 = vsub.f32 %v487, %v505
      %v509 = vsub.f32 %v488, %v506
      %v510 = vsub.f32 %v489, %v507
      %v511 = vmul.f32 %v508, %v443
      %v512 = vmul.f32 %v509, %v453
      %v513 = vmul.f32 %v510, %v463
      %v514 = vadd.f32 %v396, %v511
      %v515 = vadd.f32 %v397, %v512
      %v516 = vadd.f32 %v398, %v513
      %v517 = vmul.f32 %v415, %v493
      %v518 = vmul.f32 %v416, %v498
      %v519 = vmul.f32 %v417, %v503
      %v520 = vmul.f32 %v419, %v475
      %v521 = vmul.f32 %v420, %v480
      %v522 = vmul.f32 %v421, %v485
      %v523 = vadd.f32 %v517, %v520
      %v524 = vadd.f32 %v518, %v521
      %v525 = vadd.f32 %v519, %v522
      %v526 = vmul.f32 %v523, %v443
      %v527 = vmul.f32 %v524, %v453
      %v528 = vmul.f32 %v525, %v463
      %v529 = vadd.f32 %v411, %v526
      %v530 = vadd.f32 %v412, %v527
      %v531 = vadd.f32 %v413, %v528
      %s532 = scalar_lea.vmem %s273, 48
      %v533 = vld [vmem:[%s532] sm:$0xff]
      %v534 = vld [vmem:[%s532 + $0x8] sm:$0xff]
      %v535 = vld [vmem:[%s532 + $0x10] sm:$0x1]
      %s536 = scalar_lea.vmem %s281, 48
      %v537 = vld [vmem:[%s536] sm:$0xff]
      %v538 = vld [vmem:[%s536 + $0x8] sm:$0xff]
      %v539 = vld [vmem:[%s536 + $0x10] sm:$0x1]
      %v540 = vmul.f32 %v533, %v533
      %v541 = vmul.f32 %v534, %v534
      %v542 = vmul.f32 %v535, %v535
      %v543 = vmul.f32 %v537, %v537
      %v544 = vmul.f32 %v538, %v538
      %v545 = vmul.f32 %v539, %v539
      %v546 = vadd.f32 %v540, %v543
      %v547 = vadd.f32 %v541, %v544
      %v548 = vadd.f32 %v542, %v545
      %v549 = vadd.f32 %v546, 1e-12
      %v550 = vadd.f32 %v547, 1e-12
      %v551 = vadd.f32 %v548, 1e-12
      %v552 = vrsqrt.pop %v549
      %v553 = vmul.f32 %v552, %v549
      %v554 = vmul.f32 %v553, %v552
      %v555 = vmul.f32 0.5, %v554
      %v556 = vsub.f32 1.5, %v555
      %v557 = vmul.f32 %v552, %v556
      %vm558 = vweird.f32 %v549
      %vm559 = vweird.f32 %v552
      %vm560 = vmor %vm558, %vm559
      %v561 = vsel %vm560, %v552, %v557
      %v562 = vrsqrt.pop %v550
      %v563 = vmul.f32 %v562, %v550
      %v564 = vmul.f32 %v563, %v562
      %v565 = vmul.f32 0.5, %v564
      %v566 = vsub.f32 1.5, %v565
      %v567 = vmul.f32 %v562, %v566
      %vm568 = vweird.f32 %v550
      %vm569 = vweird.f32 %v562
      %vm570 = vmor %vm568, %vm569
      %v571 = vsel %vm570, %v562, %v567
      %v572 = vrsqrt.pop %v551
      %v573 = vmul.f32 %v572, %v551
      %v574 = vmul.f32 %v573, %v572
      %v575 = vmul.f32 0.5, %v574
      %v576 = vsub.f32 1.5, %v575
      %v577 = vmul.f32 %v572, %v576
      %vm578 = vweird.f32 %v551
      %vm579 = vweird.f32 %v572
      %vm580 = vmor %vm578, %vm579
      %v581 = vsel %vm580, %v572, %v577
      %s582 = scalar_lea.vmem %s286, 48
      %v583 = vld [vmem:[%s582] sm:$0xff]
      %v584 = vld [vmem:[%s582 + $0x8] sm:$0xff]
      %v585 = vld [vmem:[%s582 + $0x10] sm:$0x1]
      %s586 = scalar_lea.vmem %s291, 48
      %v587 = vld [vmem:[%s586] sm:$0xff]
      %v588 = vld [vmem:[%s586 + $0x8] sm:$0xff]
      %v589 = vld [vmem:[%s586 + $0x10] sm:$0x1]
      %591 = vset.pattern.permute.xlu0 0
      %592 = vperm.xlu0 %591, %v583
      %v593 = vpop.permute.xlu0 %592
      %596 = vset.pattern.permute.xlu0 0
      %597 = vperm.xlu0 %596, %v584
      %v598 = vpop.permute.xlu0 %597
      %601 = vset.pattern.permute.xlu0 0
      %602 = vperm.xlu0 %601, %v585
      %v603 = vpop.permute.xlu0 %602
      %v605 = vmul.f32 %v533, %v593
      %v606 = vmul.f32 %v534, %v598
      %v607 = vmul.f32 %v535, %v603
      %609 = vset.pattern.permute.xlu0 0
      %610 = vperm.xlu0 %609, %v587
      %v611 = vpop.permute.xlu0 %610
      %614 = vset.pattern.permute.xlu0 0
      %615 = vperm.xlu0 %614, %v588
      %v616 = vpop.permute.xlu0 %615
      %619 = vset.pattern.permute.xlu0 0
      %620 = vperm.xlu0 %619, %v589
      %v621 = vpop.permute.xlu0 %620
      %v623 = vmul.f32 %v537, %v611
      %v624 = vmul.f32 %v538, %v616
      %v625 = vmul.f32 %v539, %v621
      %v626 = vsub.f32 %v605, %v623
      %v627 = vsub.f32 %v606, %v624
      %v628 = vsub.f32 %v607, %v625
      %v629 = vmul.f32 %v626, %v561
      %v630 = vmul.f32 %v627, %v571
      %v631 = vmul.f32 %v628, %v581
      %v632 = vadd.f32 %v514, %v629
      %v633 = vadd.f32 %v515, %v630
      %v634 = vadd.f32 %v516, %v631
      %v635 = vmul.f32 %v533, %v611
      %v636 = vmul.f32 %v534, %v616
      %v637 = vmul.f32 %v535, %v621
      %v638 = vmul.f32 %v537, %v593
      %v639 = vmul.f32 %v538, %v598
      %v640 = vmul.f32 %v539, %v603
      %v641 = vadd.f32 %v635, %v638
      %v642 = vadd.f32 %v636, %v639
      %v643 = vadd.f32 %v637, %v640
      %v644 = vmul.f32 %v641, %v561
      %v645 = vmul.f32 %v642, %v571
      %v646 = vmul.f32 %v643, %v581
      %v647 = vadd.f32 %v529, %v644
      %v648 = vadd.f32 %v530, %v645
      %v649 = vadd.f32 %v531, %v646
      %s650 = scalar_lea.vmem %s273, 72
      %v651 = vld [vmem:[%s650] sm:$0xff]
      %v652 = vld [vmem:[%s650 + $0x8] sm:$0xff]
      %v653 = vld [vmem:[%s650 + $0x10] sm:$0x1]
      %s654 = scalar_lea.vmem %s281, 72
      %v655 = vld [vmem:[%s654] sm:$0xff]
      %v656 = vld [vmem:[%s654 + $0x8] sm:$0xff]
      %v657 = vld [vmem:[%s654 + $0x10] sm:$0x1]
      %v658 = vmul.f32 %v651, %v651
      %v659 = vmul.f32 %v652, %v652
      %v660 = vmul.f32 %v653, %v653
      %v661 = vmul.f32 %v655, %v655
      %v662 = vmul.f32 %v656, %v656
      %v663 = vmul.f32 %v657, %v657
      %v664 = vadd.f32 %v658, %v661
      %v665 = vadd.f32 %v659, %v662
      %v666 = vadd.f32 %v660, %v663
      %v667 = vadd.f32 %v664, 1e-12
      %v668 = vadd.f32 %v665, 1e-12
      %v669 = vadd.f32 %v666, 1e-12
      %v670 = vrsqrt.pop %v667
      %v671 = vmul.f32 %v670, %v667
      %v672 = vmul.f32 %v671, %v670
      %v673 = vmul.f32 0.5, %v672
      %v674 = vsub.f32 1.5, %v673
      %v675 = vmul.f32 %v670, %v674
      %vm676 = vweird.f32 %v667
      %vm677 = vweird.f32 %v670
      %vm678 = vmor %vm676, %vm677
      %v679 = vsel %vm678, %v670, %v675
      %v680 = vrsqrt.pop %v668
      %v681 = vmul.f32 %v680, %v668
      %v682 = vmul.f32 %v681, %v680
      %v683 = vmul.f32 0.5, %v682
      %v684 = vsub.f32 1.5, %v683
      %v685 = vmul.f32 %v680, %v684
      %vm686 = vweird.f32 %v668
      %vm687 = vweird.f32 %v680
      %vm688 = vmor %vm686, %vm687
      %v689 = vsel %vm688, %v680, %v685
      %v690 = vrsqrt.pop %v669
      %v691 = vmul.f32 %v690, %v669
      %v692 = vmul.f32 %v691, %v690
      %v693 = vmul.f32 0.5, %v692
      %v694 = vsub.f32 1.5, %v693
      %v695 = vmul.f32 %v690, %v694
      %vm696 = vweird.f32 %v669
      %vm697 = vweird.f32 %v690
      %vm698 = vmor %vm696, %vm697
      %v699 = vsel %vm698, %v690, %v695
      %s700 = scalar_lea.vmem %s286, 72
      %v701 = vld [vmem:[%s700] sm:$0xff]
      %v702 = vld [vmem:[%s700 + $0x8] sm:$0xff]
      %v703 = vld [vmem:[%s700 + $0x10] sm:$0x1]
      %s704 = scalar_lea.vmem %s291, 72
      %v705 = vld [vmem:[%s704] sm:$0xff]
      %v706 = vld [vmem:[%s704 + $0x8] sm:$0xff]
      %v707 = vld [vmem:[%s704 + $0x10] sm:$0x1]
      %709 = vset.pattern.permute.xlu0 0
      %710 = vperm.xlu0 %709, %v701
      %v711 = vpop.permute.xlu0 %710
      %714 = vset.pattern.permute.xlu0 0
      %715 = vperm.xlu0 %714, %v702
      %v716 = vpop.permute.xlu0 %715
      %719 = vset.pattern.permute.xlu0 0
      %720 = vperm.xlu0 %719, %v703
      %v721 = vpop.permute.xlu0 %720
      %v723 = vmul.f32 %v651, %v711
      %v724 = vmul.f32 %v652, %v716
      %v725 = vmul.f32 %v653, %v721
      %727 = vset.pattern.permute.xlu0 0
      %728 = vperm.xlu0 %727, %v705
      %v729 = vpop.permute.xlu0 %728
      %732 = vset.pattern.permute.xlu0 0
      %733 = vperm.xlu0 %732, %v706
      %v734 = vpop.permute.xlu0 %733
      %737 = vset.pattern.permute.xlu0 0
      %738 = vperm.xlu0 %737, %v707
      %v739 = vpop.permute.xlu0 %738
      %v741 = vmul.f32 %v655, %v729
      %v742 = vmul.f32 %v656, %v734
      %v743 = vmul.f32 %v657, %v739
      %v744 = vsub.f32 %v723, %v741
      %v745 = vsub.f32 %v724, %v742
      %v746 = vsub.f32 %v725, %v743
      %v747 = vmul.f32 %v744, %v679
      %v748 = vmul.f32 %v745, %v689
      %v749 = vmul.f32 %v746, %v699
      %v750 = vadd.f32 %v632, %v747
      %v751 = vadd.f32 %v633, %v748
      %v752 = vadd.f32 %v634, %v749
      %v753 = vmul.f32 %v651, %v729
      %v754 = vmul.f32 %v652, %v734
      %v755 = vmul.f32 %v653, %v739
      %v756 = vmul.f32 %v655, %v711
      %v757 = vmul.f32 %v656, %v716
      %v758 = vmul.f32 %v657, %v721
      %v759 = vadd.f32 %v753, %v756
      %v760 = vadd.f32 %v754, %v757
      %v761 = vadd.f32 %v755, %v758
      %v762 = vmul.f32 %v759, %v679
      %v763 = vmul.f32 %v760, %v689
      %v764 = vmul.f32 %v761, %v699
      %v765 = vadd.f32 %v647, %v762
      %v766 = vadd.f32 %v648, %v763
      %v767 = vadd.f32 %v649, %v764
      %v768 = vmul.f32 %v750, %v750
      %v769 = vmul.f32 %v751, %v751
      %v770 = vmul.f32 %v752, %v752
      %v771 = vmul.f32 %v765, %v765
      %v772 = vmul.f32 %v766, %v766
      %v773 = vmul.f32 %v767, %v767
      %v774 = vadd.f32 %v768, %v771
      %v775 = vadd.f32 %v769, %v772
      %v776 = vadd.f32 %v770, %v773
      %v777 = vsub.f32 %v774, 4.0
      %v778 = vsub.f32 %v775, 4.0
      %v779 = vsub.f32 %v776, 4.0
      %v780 = vmul.f32 %v777, 0.083333336
      %v781 = vmul.f32 %v778, 0.083333336
      %v782 = vmul.f32 %v779, 0.083333336
      %783 = vst [vmem:[%s299] sm:$0xff] %v780
      %784 = vst [vmem:[%s299 + $0x8] sm:$0xff] %v781
      %785 = vst [vmem:[%s299 + $0x10] sm:$0x1] %v782
      %p786 = scmp.lt.s32.totalorder %s19, 1
      %s787 = scalar_select %p786, %s19, 1
      %p788 = scmp.lt.s32.totalorder %s20, 0
      %s789 = scalar_select %p788, %s20, 0
      %s790 = smul.addr %s787, 3
      %s791 = sadd.s32 %s789, %s790
      %s792 = smul.addr %s791, 8
      %s793 = scalar_lea.vmem %s4, %s792
      // Predicated region
      $region37: #{tpu_custom_call.1} parent=35 // pred_check
        %p794 = pneg %p155
      $region38: #{tpu_custom_call.1} parent=35 // pred_check_branch
        %796 = sbr.rel (%p794) target = $region40
      $region39: #{tpu_custom_call.1} parent=35 // pred_region
        _
      $region40: #{tpu_custom_call.1} parent=35 // pred_fallthru
        _
    $region36: #{tpu_custom_call.1} parent=5 // pred_fallthru
      _
    %p797 = scmp.le.s32.totalorder 2, %s10
    // Predicated region
    $region41: #{tpu_custom_call.1} parent=5 // pred_check
      %p798 = pneg %p797
    $region42: #{tpu_custom_call.1} parent=5 // pred_check_branch
      %800 = sbr.rel (%p798) target = $region44
    $region43: #{tpu_custom_call.1} parent=5 // pred_region
      %s801 = ssub.s32 %s10, 2
      // Predicated region
      $region45: #{tpu_custom_call.1} parent=43 // pred_check
        %p802 = pneg %p161
      $region46: #{tpu_custom_call.1} parent=43 // pred_check_branch
        %804 = sbr.rel (%p802) target = $region48
      $region47: #{tpu_custom_call.1} parent=43 // pred_region
        %p805 = scmp.lt.s32.totalorder %s21, 1
        %s806 = scalar_select %p805, %s21, 1
        %p807 = scmp.lt.s32.totalorder %s22, 0
        %s808 = scalar_select %p807, %s22, 0
        %s809 = smul.addr %s806, 3
        %s810 = sadd.s32 %s808, %s809
        %s811 = smul.addr %s810, 8
        %s812 = scalar_lea.vmem %s4, %s811
      $region48: #{tpu_custom_call.1} parent=43 // pred_fallthru
        _
    $region44: #{tpu_custom_call.1} parent=5 // pred_fallthru
      _
  $region6: #{tpu_custom_call.1} parent=0 // loop_footer
    %s14 = sadd.s32 1, %s10
  $region7: #{tpu_custom_call.1} parent=0 // loop_footer_branch
    %9 = sbr.rel target = $region3
  $region8: #{tpu_custom_call.1} parent=0 // loop_exit
    _

</llo_original>
